<compile_context>
chip_gen: v5e
topology: v5e:2x2
jax: 0.10.0
libtpu: 0.0.40
codegen_flags: <defaults>
</compile_context>

<pallas_src>
import jax
import jax.numpy as jnp
from jax.experimental import pallas as pl
from jax.experimental.pallas import tpu as pltpu


# ----------------------------------------------------------------------------
# Kernel
# ----------------------------------------------------------------------------
def _mlp_kernel(x_ref,
                w1_ref, b1_ref,
                w2_ref, b2_ref,
                w3_ref, b3_ref,
                w4_ref, b4_ref,
                out_ref):
    # x / w are bf16, biases f32; all matmuls accumulate in f32 on the MXU,
    # elementwise bias-add + ReLU in f32, activations re-cast to bf16 between
    # layers to keep the MXU on its fast bf16 path.
    h = x_ref[...]                                                     # bf16

    h = jnp.dot(h, w1_ref[...], preferred_element_type=jnp.float32)
    h = jnp.maximum(h + b1_ref[...], 0.0)

    h = jnp.dot(h.astype(jnp.bfloat16), w2_ref[...],
                preferred_element_type=jnp.float32)
    h = jnp.maximum(h + b2_ref[...], 0.0)

    h = jnp.dot(h.astype(jnp.bfloat16), w3_ref[...],
                preferred_element_type=jnp.float32)
    h = jnp.maximum(h + b3_ref[...], 0.0)

    h = jnp.dot(h.astype(jnp.bfloat16), w4_ref[...],
                preferred_element_type=jnp.float32)
    h = jnp.maximum(h + b4_ref[...], 0.0)      # reference applies ReLU on last layer too

    out_ref[...] = h.astype(out_ref.dtype)     # lane-dense (padded to 128) f32 store


# ----------------------------------------------------------------------------
# Wrapper
# ----------------------------------------------------------------------------
def _round_up(x, m):
    return (x + m - 1) // m * m


def _pad2d(a, rows, cols):
    return jnp.pad(a, ((0, rows - a.shape[0]), (0, cols - a.shape[1])))


def mlp_forward(x, params, tile_b=None):
    """params = [(w1, b1), ..., (w4, b4)] with w_i shaped (in, out)."""
    assert len(params) == 4
    batch, in_features = x.shape
    num_classes = params[-1][0].shape[1]

    # Padded (lane-dense) feature dims: everything a multiple of 128.
    dims = [in_features] + [w.shape[1] for (w, _) in params]
    pdims = [_round_up(d, 128) for d in dims]

    # Batch tile: >=128 rows to fill MXU, 256 for larger batches.
    if tile_b is None:
        tile_b = min(256, _round_up(batch, 128))
    padded_batch = _round_up(batch, tile_b)
    grid = (padded_batch // tile_b,)

    # ---- pad + cast operands -------------------------------------------------
    x_p = jnp.pad(
        x, ((0, padded_batch - batch), (0, pdims[0] - in_features))
    ).astype(jnp.bfloat16)

    flat_args = [x_p]
    in_specs = [pl.BlockSpec((tile_b, pdims[0]), lambda i: (i, 0))]

    for li, (w, b) in enumerate(params):
        d_in, d_out = pdims[li], pdims[li + 1]
        # Zero padding keeps the math identical: padded input columns are 0,
        # padded output lanes get 0 weight + 0 bias -> stay 0 through ReLU.
        w_p = _pad2d(w, d_in, d_out).astype(jnp.bfloat16)
        b_p = jnp.pad(b, (0, d_out - b.shape[0])).reshape(1, -1).astype(jnp.float32)
        flat_args += [w_p, b_p]
        # Weights / biases are tiny -> keep them VMEM-resident across the grid.
        in_specs += [
            pl.BlockSpec((d_in, d_out), lambda i: (0, 0)),
            pl.BlockSpec((1, d_out), lambda i: (0, 0)),
        ]

    out_pad = pdims[-1]

    # ---- scheduler hint --------------------------------------------------------
    flops = 2 * padded_batch * sum(pdims[i] * pdims[i + 1] for i in range(4))
    bytes_accessed = (
        x_p.size * x_p.dtype.itemsize
        + sum(a.size * a.dtype.itemsize for a in flat_args[1:])
        + padded_batch * out_pad * 4
    )
    cost = pl.CostEstimate(flops=flops, transcendentals=0,
                           bytes_accessed=bytes_accessed)

    out_padded = pl.pallas_call(
        _mlp_kernel,
        out_shape=jax.ShapeDtypeStruct((padded_batch, out_pad), jnp.float32),
        grid=grid,
        in_specs=in_specs,
        out_specs=pl.BlockSpec((tile_b, out_pad), lambda i: (i, 0)),
        compiler_params=pltpu.CompilerParams(
            dimension_semantics=("parallel",),      # shard batch tiles across TCs (v7x)
            vmem_limit_bytes=32 * 1024 * 1024,      # tiny footprint; safe on 64 MiB v7x
        ),
        cost_estimate=cost,
    )(*flat_args)

    # Slice back to the logical (unpadded) output.
    return out_padded[:batch, :num_classes]


# ----------------------------------------------------------------------------
# Params / reference
# ----------------------------------------------------------------------------
def init_params(key, input_size, hidden_layers, num_classes, dtype=jnp.float32):
    """Deterministic synthetic init (uniform, PyTorch-Linear-style bounds)."""
    dims = [input_size, hidden_layers[0], hidden_layers[1], hidden_layers[2],
            num_classes]
    params = []
    for i in range(4):
        fan_in, fan_out = dims[i], dims[i + 1]
        key, kw, kb = jax.random.split(key, 3)
        bound = 1.0 / jnp.sqrt(jnp.asarray(fan_in, dtype))
        w = jax.random.uniform(kw, (fan_in, fan_out), dtype, -bound, bound)
        b = jax.random.uniform(kb, (fan_out,), dtype, -bound, bound)
        params.append((w, b))
    return params


def mlp_reference_bf16(x, params):
    """Same numerics as the kernel: bf16 operands, f32 accumulation/elementwise."""
    h = x.astype(jnp.bfloat16)
    for idx, (w, b) in enumerate(params):
        acc = jnp.dot(h, w.astype(jnp.bfloat16),
                      preferred_element_type=jnp.float32)
        acc = jnp.maximum(acc + b.astype(jnp.float32), 0.0)
        h = acc.astype(jnp.bfloat16) if idx < len(params) - 1 else acc
    return h


def mlp_reference_f32(x, params):
    h = x
    for (w, b) in params:
        h = jnp.maximum(jnp.dot(h, w) + b, 0.0)
    return h


# ----------------------------------------------------------------------------
# Test
# ----------------------------------------------------------------------------
if __name__ == "__main__":
    key = jax.random.PRNGKey(0)

    batch = 8
    input_size = 32
    hidden_layers = [64, 64, 32]
    num_classes = 16

    key, kx = jax.random.split(key)
    x = jax.random.normal(kx, (batch, input_size), jnp.float32)
    params = init_params(key, input_size, hidden_layers, num_classes)

    out = mlp_forward(x, params)
    out = jax.block_until_ready(out)
    assert out.shape == (batch, num_classes)

    # Exact-numerics reference (bf16 operands, f32 accumulation), tight tol.
    ref_bf16 = mlp_reference_bf16(x, params)
    assert jnp.allclose(out, ref_bf16, atol=1e-3, rtol=1e-3), \
        "mismatch vs bf16-matched JAX reference"

    # Loose sanity check vs full-f32 reference (bf16 quantization error only).
    ref_f32 = mlp_reference_f32(x, params)
    assert jnp.allclose(out, ref_f32, atol=5e-2, rtol=5e-2), \
        "mismatch vs f32 JAX reference"

    print("KERNEL_OK")
</pallas_src>

<mosaic_0001>
module attributes {stable_mosaic.version = 11 : i64} {
  func.func @_mlp_kernel(%arg0: i32, %arg1: memref<128x128xbf16, #tpu.memory_space<vmem>>, %arg2: memref<128x128xbf16, #tpu.memory_space<vmem>>, %arg3: memref<1x128xf32, #tpu.memory_space<vmem>>, %arg4: memref<128x128xbf16, #tpu.memory_space<vmem>>, %arg5: memref<1x128xf32, #tpu.memory_space<vmem>>, %arg6: memref<128x128xbf16, #tpu.memory_space<vmem>>, %arg7: memref<1x128xf32, #tpu.memory_space<vmem>>, %arg8: memref<128x128xbf16, #tpu.memory_space<vmem>>, %arg9: memref<1x128xf32, #tpu.memory_space<vmem>>, %arg10: memref<128x128xf32, #tpu.memory_space<vmem>>) attributes {dimension_semantics = [#tpu.dimension_semantics<parallel>], iteration_bounds = array<i64: 1>, scalar_prefetch = 0 : i64, scratch_operands = 0 : i64, tpu.core_type = #tpu.core_type<tc>, window_params = [{transform_indices = @transform_0, window_bounds = array<i64: 128, 128>}, {pipeline_mode = #tpu.pipeline_mode<synchronous>, transform_indices = @transform_1, window_bounds = array<i64: 128, 128>}, {pipeline_mode = #tpu.pipeline_mode<synchronous>, transform_indices = @transform_2, window_bounds = array<i64: 1, 128>}, {pipeline_mode = #tpu.pipeline_mode<synchronous>, transform_indices = @transform_3, window_bounds = array<i64: 128, 128>}, {pipeline_mode = #tpu.pipeline_mode<synchronous>, transform_indices = @transform_4, window_bounds = array<i64: 1, 128>}, {pipeline_mode = #tpu.pipeline_mode<synchronous>, transform_indices = @transform_5, window_bounds = array<i64: 128, 128>}, {pipeline_mode = #tpu.pipeline_mode<synchronous>, transform_indices = @transform_6, window_bounds = array<i64: 1, 128>}, {pipeline_mode = #tpu.pipeline_mode<synchronous>, transform_indices = @transform_7, window_bounds = array<i64: 128, 128>}, {pipeline_mode = #tpu.pipeline_mode<synchronous>, transform_indices = @transform_8, window_bounds = array<i64: 1, 128>}, {transform_indices = @transform_9, window_bounds = array<i64: 128, 128>}]} {
    %c0 = arith.constant 0 : index
    %c0_0 = arith.constant 0 : index
    %0 = vector.load %arg1[%c0, %c0_0] : memref<128x128xbf16, #tpu.memory_space<vmem>>, vector<128x128xbf16>
    %c0_1 = arith.constant 0 : index
    %c0_2 = arith.constant 0 : index
    %1 = vector.load %arg2[%c0_1, %c0_2] : memref<128x128xbf16, #tpu.memory_space<vmem>>, vector<128x128xbf16>
    %cst = arith.constant dense<0.000000e+00> : vector<128x128xf32>
    %2 = tpu.matmul %0, %1, %cst {dimension_numbers = #tpu.dot_dimension_numbers<[1], [0], [0], [1], [0, 0, 1, 1], [], []>} : vector<128x128xbf16>, vector<128x128xbf16>, vector<128x128xf32> -> vector<128x128xf32>
    %c0_3 = arith.constant 0 : index
    %c0_4 = arith.constant 0 : index
    %3 = vector.load %arg3[%c0_3, %c0_4] : memref<1x128xf32, #tpu.memory_space<vmem>>, vector<1x128xf32>
    %4 = vector.broadcast %3 : vector<1x128xf32> to vector<128x128xf32>
    %5 = arith.addf %2, %4 : vector<128x128xf32>
    %cst_5 = arith.constant 0.000000e+00 : f32
    %6 = vector.broadcast %cst_5 : f32 to vector<128x128xf32>
    %7 = arith.maximumf %5, %6 : vector<128x128xf32>
    %8 = arith.truncf %7 : vector<128x128xf32> to vector<128x128xbf16>
    %c0_6 = arith.constant 0 : index
    %c0_7 = arith.constant 0 : index
    %9 = vector.load %arg4[%c0_6, %c0_7] : memref<128x128xbf16, #tpu.memory_space<vmem>>, vector<128x128xbf16>
    %cst_8 = arith.constant dense<0.000000e+00> : vector<128x128xf32>
    %10 = tpu.matmul %8, %9, %cst_8 {dimension_numbers = #tpu.dot_dimension_numbers<[1], [0], [0], [1], [0, 0, 1, 1], [], []>} : vector<128x128xbf16>, vector<128x128xbf16>, vector<128x128xf32> -> vector<128x128xf32>
    %c0_9 = arith.constant 0 : index
    %c0_10 = arith.constant 0 : index
    %11 = vector.load %arg5[%c0_9, %c0_10] : memref<1x128xf32, #tpu.memory_space<vmem>>, vector<1x128xf32>
    %12 = vector.broadcast %11 : vector<1x128xf32> to vector<128x128xf32>
    %13 = arith.addf %10, %12 : vector<128x128xf32>
    %cst_11 = arith.constant 0.000000e+00 : f32
    %14 = vector.broadcast %cst_11 : f32 to vector<128x128xf32>
    %15 = arith.maximumf %13, %14 : vector<128x128xf32>
    %16 = arith.truncf %15 : vector<128x128xf32> to vector<128x128xbf16>
    %c0_12 = arith.constant 0 : index
    %c0_13 = arith.constant 0 : index
    %17 = vector.load %arg6[%c0_12, %c0_13] : memref<128x128xbf16, #tpu.memory_space<vmem>>, vector<128x128xbf16>
    %cst_14 = arith.constant dense<0.000000e+00> : vector<128x128xf32>
    %18 = tpu.matmul %16, %17, %cst_14 {dimension_numbers = #tpu.dot_dimension_numbers<[1], [0], [0], [1], [0, 0, 1, 1], [], []>} : vector<128x128xbf16>, vector<128x128xbf16>, vector<128x128xf32> -> vector<128x128xf32>
    %c0_15 = arith.constant 0 : index
    %c0_16 = arith.constant 0 : index
    %19 = vector.load %arg7[%c0_15, %c0_16] : memref<1x128xf32, #tpu.memory_space<vmem>>, vector<1x128xf32>
    %20 = vector.broadcast %19 : vector<1x128xf32> to vector<128x128xf32>
    %21 = arith.addf %18, %20 : vector<128x128xf32>
    %cst_17 = arith.constant 0.000000e+00 : f32
    %22 = vector.broadcast %cst_17 : f32 to vector<128x128xf32>
    %23 = arith.maximumf %21, %22 : vector<128x128xf32>
    %24 = arith.truncf %23 : vector<128x128xf32> to vector<128x128xbf16>
    %c0_18 = arith.constant 0 : index
    %c0_19 = arith.constant 0 : index
    %25 = vector.load %arg8[%c0_18, %c0_19] : memref<128x128xbf16, #tpu.memory_space<vmem>>, vector<128x128xbf16>
    %cst_20 = arith.constant dense<0.000000e+00> : vector<128x128xf32>
    %26 = tpu.matmul %24, %25, %cst_20 {dimension_numbers = #tpu.dot_dimension_numbers<[1], [0], [0], [1], [0, 0, 1, 1], [], []>} : vector<128x128xbf16>, vector<128x128xbf16>, vector<128x128xf32> -> vector<128x128xf32>
    %c0_21 = arith.constant 0 : index
    %c0_22 = arith.constant 0 : index
    %27 = vector.load %arg9[%c0_21, %c0_22] : memref<1x128xf32, #tpu.memory_space<vmem>>, vector<1x128xf32>
    %28 = vector.broadcast %27 : vector<1x128xf32> to vector<128x128xf32>
    %29 = arith.addf %26, %28 : vector<128x128xf32>
    %cst_23 = arith.constant 0.000000e+00 : f32
    %30 = vector.broadcast %cst_23 : f32 to vector<128x128xf32>
    %31 = arith.maximumf %29, %30 : vector<128x128xf32>
    %c0_24 = arith.constant 0 : index
    %c0_25 = arith.constant 0 : index
    %32 = vector.load %arg10[%c0_24, %c0_25] : memref<128x128xf32, #tpu.memory_space<vmem>>, vector<128x128xf32>
    tpu.vector_store %arg10[%c0_24, %c0_25], %31 {strides = array<i32>} : memref<128x128xf32, #tpu.memory_space<vmem>>, vector<128x128xf32>,
    return
  }
  func.func @transform_0(%arg0: i32) -> (i32, i32) {
    %c0_i32 = arith.constant 0 : i32
    %c0_i32_0 = arith.constant 0 : i32
    return %arg0, %c0_i32 : i32, i32
  }
  func.func @transform_1(%arg0: i32) -> (i32, i32) {
    %c0_i32 = arith.constant 0 : i32
    %c0_i32_0 = arith.constant 0 : i32
    %c0_i32_1 = arith.constant 0 : i32
    return %c0_i32, %c0_i32_0 : i32, i32
  }
  func.func @transform_2(%arg0: i32) -> (i32, i32) {
    %c0_i32 = arith.constant 0 : i32
    %c0_i32_0 = arith.constant 0 : i32
    %c0_i32_1 = arith.constant 0 : i32
    return %c0_i32, %c0_i32_0 : i32, i32
  }
  func.func @transform_3(%arg0: i32) -> (i32, i32) {
    %c0_i32 = arith.constant 0 : i32
    %c0_i32_0 = arith.constant 0 : i32
    %c0_i32_1 = arith.constant 0 : i32
    return %c0_i32, %c0_i32_0 : i32, i32
  }
  func.func @transform_4(%arg0: i32) -> (i32, i32) {
    %c0_i32 = arith.constant 0 : i32
    %c0_i32_0 = arith.constant 0 : i32
    %c0_i32_1 = arith.constant 0 : i32
    return %c0_i32, %c0_i32_0 : i32, i32
  }
  func.func @transform_5(%arg0: i32) -> (i32, i32) {
    %c0_i32 = arith.constant 0 : i32
    %c0_i32_0 = arith.constant 0 : i32
    %c0_i32_1 = arith.constant 0 : i32
    return %c0_i32, %c0_i32_0 : i32, i32
  }
  func.func @transform_6(%arg0: i32) -> (i32, i32) {
    %c0_i32 = arith.constant 0 : i32
    %c0_i32_0 = arith.constant 0 : i32
    %c0_i32_1 = arith.constant 0 : i32
    return %c0_i32, %c0_i32_0 : i32, i32
  }
  func.func @transform_7(%arg0: i32) -> (i32, i32) {
    %c0_i32 = arith.constant 0 : i32
    %c0_i32_0 = arith.constant 0 : i32
    %c0_i32_1 = arith.constant 0 : i32
    return %c0_i32, %c0_i32_0 : i32, i32
  }
  func.func @transform_8(%arg0: i32) -> (i32, i32) {
    %c0_i32 = arith.constant 0 : i32
    %c0_i32_0 = arith.constant 0 : i32
    %c0_i32_1 = arith.constant 0 : i32
    return %c0_i32, %c0_i32_0 : i32, i32
  }
  func.func @transform_9(%arg0: i32) -> (i32, i32) {
    %c0_i32 = arith.constant 0 : i32
    %c0_i32_0 = arith.constant 0 : i32
    return %arg0, %c0_i32 : i32, i32
  }
}

</mosaic_0001>

<llo_original>
// kernel: tpu_custom_call.1
$region0: #{tpu_custom_call.1}
  #allocation0 [shape = 'u32[]', space=smem, size = 0x4, offset = 0x4, fixed_abs, tag = 'smem constant byte address 0x4 - core index']
  #allocation1 [shape = 'u32[72,128]{1,0:T(1,128)}', space=vmem, size = 0x9000, scoped, tag = 'internal scratch']
  %s0 = inlined_call_operand.hbm [shape: bf16[128,128], index: 0, kind: input, shape index: {}]
  %s1 = inlined_call_operand.hbm [shape: bf16[128,128], index: 1, kind: input, shape index: {}]
  %s2 = inlined_call_operand.vmem [shape: f32[1,128], index: 2, kind: input, shape index: {}]
  %s3 = inlined_call_operand.hbm [shape: bf16[128,128], index: 3, kind: input, shape index: {}]
  %s4 = inlined_call_operand.vmem [shape: f32[1,128], index: 4, kind: input, shape index: {}]
  %s5 = inlined_call_operand.hbm [shape: bf16[128,128], index: 5, kind: input, shape index: {}]
  %s6 = inlined_call_operand.vmem [shape: f32[1,128], index: 6, kind: input, shape index: {}]
  %s7 = inlined_call_operand.hbm [shape: bf16[128,128], index: 7, kind: input, shape index: {}]
  %s8 = inlined_call_operand.vmem [shape: f32[1,128], index: 8, kind: input, shape index: {}]
  %s9 = inlined_call_operand.hbm [shape: f32[128,128], index: 9, kind: output, shape index: {}]
  %s10 = sld [smem:[#allocation0]]
  $region66: #{tpu_custom_call.1} parent=0
    _
  %s12 = ssub.s32 1, %s10
  %s13 = scalar_select 0, %s12, %s10
  $region1: #{tpu_custom_call.1} parent=0
    #allocation2 [shape = 'u8[32768]{0}', space=vmem, size = 0x8000, scoped, tag = 'input window, operand 0, single buffered']
    #allocation3 [shape = 's32[1]{0}', space=sflag, size = 0x4, scoped, tag = 'scoped memory for tpu_custom_call.1']
    #allocation4 [shape = 's32[1]{0}', space=sflag, size = 0x4, scoped, tag = 'scoped memory for tpu_custom_call.1']
    #allocation5 [shape = 'u8[32768]{0}', space=vmem, size = 0x8000, scoped, tag = 'input window, operand 1, single buffered']
    #allocation6 [shape = 's32[1]{0}', space=sflag, size = 0x4, scoped, tag = 'scoped memory for tpu_custom_call.1']
    #allocation7 [shape = 'u8[32768]{0}', space=vmem, size = 0x8000, scoped, tag = 'input window, operand 3, single buffered']
    #allocation8 [shape = 'u8[32768]{0}', space=vmem, size = 0x8000, scoped, tag = 'input window, operand 5, single buffered']
    #allocation9 [shape = 's32[1]{0}', space=sflag, size = 0x4, scoped, tag = 'scoped memory for tpu_custom_call.1']
    #allocation10 [shape = 'u8[32768]{0}', space=vmem, size = 0x8000, scoped, tag = 'input window, operand 7, single buffered']
    #allocation11 [shape = 'u8[65536]{0}', space=vmem, size = 0x10000, scoped, tag = 'output window, operand 0, single buffered']
    %14 = vsyncpa [#allocation3], 0
    %15 = vsyncpa [#allocation6], 0
    %16 = vsyncpa [#allocation9], 0
    %17 = vsyncpa [#allocation4], 0
    // Predicated region
    $region2: #{tpu_custom_call.1} parent=1 // pred_check
      _
    $region3: #{tpu_custom_call.1} parent=1 // pred_check_branch
      %19 = sbr.rel (0) target = $region5
    $region4: #{tpu_custom_call.1} parent=1 // pred_region
      %21 = vsyncadd [#allocation3], 0
      %s22 = sshll.u32 %s0, 4
      %s23 = int_to_ptr.hbm [resolvable:$true] %s22
      %s24 = sshll.u32 [#allocation2], 4
      %s25 = int_to_ptr.vmem [resolvable:$true] %s24
      %30 = dma.hbm_to_vmem [thread:$0]  %s23, 1024, %s25, [#allocation3], 64, 64, 4
    $region5: #{tpu_custom_call.1} parent=1 // pred_fallthru
      _
    // Predicated region
    $region6: #{tpu_custom_call.1} parent=1 // pred_check
      _
    $region7: #{tpu_custom_call.1} parent=1 // pred_check_branch
      %32 = sbr.rel (0) target = $region9
    $region8: #{tpu_custom_call.1} parent=1 // pred_region
      %34 = vsyncadd [#allocation6], 0
      %s35 = sshll.u32 %s1, 4
      %s36 = int_to_ptr.hbm [resolvable:$true] %s35
      %s37 = sshll.u32 [#allocation5], 4
      %s38 = int_to_ptr.vmem [resolvable:$true] %s37
      %43 = dma.hbm_to_vmem [thread:$0]  %s36, 1024, %s38, [#allocation6], 64, 64, 4
    $region9: #{tpu_custom_call.1} parent=1 // pred_fallthru
      _
    // Predicated region
    $region10: #{tpu_custom_call.1} parent=1 // pred_check
      _
    $region11: #{tpu_custom_call.1} parent=1 // pred_check_branch
      %45 = sbr.rel (0) target = $region13
    $region12: #{tpu_custom_call.1} parent=1 // pred_region
      _
    $region13: #{tpu_custom_call.1} parent=1 // pred_fallthru
      _
    // Predicated region
    $region14: #{tpu_custom_call.1} parent=1 // pred_check
      _
    $region15: #{tpu_custom_call.1} parent=1 // pred_check_branch
      %47 = sbr.rel (0) target = $region17
    $region16: #{tpu_custom_call.1} parent=1 // pred_region
      %49 = vsyncadd [#allocation6], 0
      %s50 = sshll.u32 %s3, 4
      %s51 = int_to_ptr.hbm [resolvable:$true] %s50
      %s52 = sshll.u32 [#allocation7], 4
      %s53 = int_to_ptr.vmem [resolvable:$true] %s52
      %58 = dma.hbm_to_vmem [thread:$0]  %s51, 1024, %s53, [#allocation6], 64, 64, 4
    $region17: #{tpu_custom_call.1} parent=1 // pred_fallthru
      _
    // Predicated region
    $region18: #{tpu_custom_call.1} parent=1 // pred_check
      _
    $region19: #{tpu_custom_call.1} parent=1 // pred_check_branch
      %60 = sbr.rel (0) target = $region21
    $region20: #{tpu_custom_call.1} parent=1 // pred_region
      _
    $region21: #{tpu_custom_call.1} parent=1 // pred_fallthru
      _
    // Predicated region
    $region22: #{tpu_custom_call.1} parent=1 // pred_check
      _
    $region23: #{tpu_custom_call.1} parent=1 // pred_check_branch
      %62 = sbr.rel (0) target = $region25
    $region24: #{tpu_custom_call.1} parent=1 // pred_region
      %64 = vsyncadd [#allocation9], 0
      %s65 = sshll.u32 %s5, 4
      %s66 = int_to_ptr.hbm [resolvable:$true] %s65
      %s67 = sshll.u32 [#allocation8], 4
      %s68 = int_to_ptr.vmem [resolvable:$true] %s67
      %73 = dma.hbm_to_vmem [thread:$0]  %s66, 1024, %s68, [#allocation9], 64, 64, 4
    $region25: #{tpu_custom_call.1} parent=1 // pred_fallthru
      _
    // Predicated region
    $region26: #{tpu_custom_call.1} parent=1 // pred_check
      _
    $region27: #{tpu_custom_call.1} parent=1 // pred_check_branch
      %75 = sbr.rel (0) target = $region29
    $region28: #{tpu_custom_call.1} parent=1 // pred_region
      _
    $region29: #{tpu_custom_call.1} parent=1 // pred_fallthru
      _
    // Predicated region
    $region30: #{tpu_custom_call.1} parent=1 // pred_check
      _
    $region31: #{tpu_custom_call.1} parent=1 // pred_check_branch
      %77 = sbr.rel (0) target = $region33
    $region32: #{tpu_custom_call.1} parent=1 // pred_region
      %79 = vsyncadd [#allocation9], 0
      %s80 = sshll.u32 %s7, 4
      %s81 = int_to_ptr.hbm [resolvable:$true] %s80
      %s82 = sshll.u32 [#allocation10], 4
      %s83 = int_to_ptr.vmem [resolvable:$true] %s82
      %88 = dma.hbm_to_vmem [thread:$0]  %s81, 1024, %s83, [#allocation9], 64, 64, 4
    $region33: #{tpu_custom_call.1} parent=1 // pred_fallthru
      _
    // Predicated region
    $region34: #{tpu_custom_call.1} parent=1 // pred_check
      _
    $region35: #{tpu_custom_call.1} parent=1 // pred_check_branch
      %90 = sbr.rel (0) target = $region37
    $region36: #{tpu_custom_call.1} parent=1 // pred_region
      _
    $region37: #{tpu_custom_call.1} parent=1 // pred_fallthru
      _
    // Predicated region
    $region38: #{tpu_custom_call.1} parent=1 // pred_check
      _
    $region39: #{tpu_custom_call.1} parent=1 // pred_check_branch
      %92 = sbr.rel (0) target = $region41
    $region40: #{tpu_custom_call.1} parent=1 // pred_region
      %94 = dma.done [#allocation3], 1024
    $region41: #{tpu_custom_call.1} parent=1 // pred_fallthru
      _
    // Predicated region
    $region42: #{tpu_custom_call.1} parent=1 // pred_check
      _
    $region43: #{tpu_custom_call.1} parent=1 // pred_check_branch
      %96 = sbr.rel (0) target = $region45
    $region44: #{tpu_custom_call.1} parent=1 // pred_region
      %98 = dma.done [#allocation6], 1024
    $region45: #{tpu_custom_call.1} parent=1 // pred_fallthru
      _
    // Predicated region
    $region46: #{tpu_custom_call.1} parent=1 // pred_check
      _
    $region47: #{tpu_custom_call.1} parent=1 // pred_check_branch
      %100 = sbr.rel (0) target = $region49
    $region48: #{tpu_custom_call.1} parent=1 // pred_region
      %102 = dma.done [#allocation6], 1024
    $region49: #{tpu_custom_call.1} parent=1 // pred_fallthru
      _
    // Predicated region
    $region50: #{tpu_custom_call.1} parent=1 // pred_check
      _
    $region51: #{tpu_custom_call.1} parent=1 // pred_check_branch
      %104 = sbr.rel (0) target = $region53
    $region52: #{tpu_custom_call.1} parent=1 // pred_region
      %106 = dma.done [#allocation9], 1024
    $region53: #{tpu_custom_call.1} parent=1 // pred_fallthru
      _
    // Predicated region
    $region54: #{tpu_custom_call.1} parent=1 // pred_check
      _
    $region55: #{tpu_custom_call.1} parent=1 // pred_check_branch
      %108 = sbr.rel (0) target = $region57
    $region56: #{tpu_custom_call.1} parent=1 // pred_region
      %110 = dma.done [#allocation9], 1024
    $region57: #{tpu_custom_call.1} parent=1 // pred_fallthru
      _
    %v111 = vld [vmem:[#allocation2] sm:$0xf]
    %v112 = vld [vmem:[#allocation2 + $0x4] sm:$0xf]
    %v113 = vld [vmem:[#allocation2 + $0x8] sm:$0xf]
    %v114 = vld [vmem:[#allocation2 + $0xc] sm:$0xf]
    %v115 = vld [vmem:[#allocation2 + $0x10] sm:$0xf]
    %v116 = vld [vmem:[#allocation2 + $0x14] sm:$0xf]
    %v117 = vld [vmem:[#allocation2 + $0x18] sm:$0xf]
    %v118 = vld [vmem:[#allocation2 + $0x1c] sm:$0xf]
    %v119 = vld [vmem:[#allocation2 + $0x20] sm:$0xf]
    %v120 = vld [vmem:[#allocation2 + $0x24] sm:$0xf]
    %v121 = vld [vmem:[#allocation2 + $0x28] sm:$0xf]
    %v122 = vld [vmem:[#allocation2 + $0x2c] sm:$0xf]
    %v123 = vld [vmem:[#allocation2 + $0x30] sm:$0xf]
    %v124 = vld [vmem:[#allocation2 + $0x34] sm:$0xf]
    %v125 = vld [vmem:[#allocation2 + $0x38] sm:$0xf]
    %v126 = vld [vmem:[#allocation2 + $0x3c] sm:$0xf]
    %v127 = vld [vmem:[#allocation5] sm:$0xf]
    %v128 = vld [vmem:[#allocation5 + $0x4] sm:$0xf]
    %v129 = vld [vmem:[#allocation5 + $0x8] sm:$0xf]
    %v130 = vld [vmem:[#allocation5 + $0xc] sm:$0xf]
    %v131 = vld [vmem:[#allocation5 + $0x10] sm:$0xf]
    %v132 = vld [vmem:[#allocation5 + $0x14] sm:$0xf]
    %v133 = vld [vmem:[#allocation5 + $0x18] sm:$0xf]
    %v134 = vld [vmem:[#allocation5 + $0x1c] sm:$0xf]
    %v135 = vld [vmem:[#allocation5 + $0x20] sm:$0xf]
    %v136 = vld [vmem:[#allocation5 + $0x24] sm:$0xf]
    %v137 = vld [vmem:[#allocation5 + $0x28] sm:$0xf]
    %v138 = vld [vmem:[#allocation5 + $0x2c] sm:$0xf]
    %v139 = vld [vmem:[#allocation5 + $0x30] sm:$0xf]
    %v140 = vld [vmem:[#allocation5 + $0x34] sm:$0xf]
    %v141 = vld [vmem:[#allocation5 + $0x38] sm:$0xf]
    %v142 = vld [vmem:[#allocation5 + $0x3c] sm:$0xf]
    %v143 = vld [vmem:[%s2] sm:$0x1]
    %v145 = vperm.slane %v143, 0
    %v163 = vunpack.c.l.b16 %v111
    %v164 = vunpack.c.l.b16 %v112
    %v165 = vunpack.c.l.b16 %v113
    %v166 = vunpack.c.l.b16 %v114
    %v167 = vunpack.c.l.b16 %v115
    %v168 = vunpack.c.l.b16 %v116
    %v169 = vunpack.c.l.b16 %v117
    %v170 = vunpack.c.l.b16 %v118
    %v171 = vunpack.c.l.b16 %v119
    %v172 = vunpack.c.l.b16 %v120
    %v173 = vunpack.c.l.b16 %v121
    %v174 = vunpack.c.l.b16 %v122
    %v175 = vunpack.c.l.b16 %v123
    %v176 = vunpack.c.l.b16 %v124
    %v177 = vunpack.c.l.b16 %v125
    %v178 = vunpack.c.l.b16 %v126
    %v179 = vpack.c.b16 %v164, %v163
    %v180 = vpack.c.b16 %v166, %v165
    %v181 = vpack.c.b16 %v168, %v167
    %v182 = vpack.c.b16 %v170, %v169
    %v183 = vpack.c.b16 %v172, %v171
    %v184 = vpack.c.b16 %v174, %v173
    %v185 = vpack.c.b16 %v176, %v175
    %v186 = vpack.c.b16 %v178, %v177
    %v211 = vunpack.c.l.b16 %v127
    %v212 = vunpack.c.l.b16 %v128
    %v213 = vunpack.c.l.b16 %v129
    %v214 = vunpack.c.l.b16 %v130
    %v215 = vunpack.c.l.b16 %v131
    %v216 = vunpack.c.l.b16 %v132
    %v217 = vunpack.c.l.b16 %v133
    %v218 = vunpack.c.l.b16 %v134
    %v219 = vunpack.c.l.b16 %v135
    %v220 = vunpack.c.l.b16 %v136
    %v221 = vunpack.c.l.b16 %v137
    %v222 = vunpack.c.l.b16 %v138
    %v223 = vunpack.c.l.b16 %v139
    %v224 = vunpack.c.l.b16 %v140
    %v225 = vunpack.c.l.b16 %v141
    %v226 = vunpack.c.l.b16 %v142
    %v227 = vpack.c.b16 %v212, %v211
    %v228 = vpack.c.b16 %v214, %v213
    %v229 = vpack.c.b16 %v216, %v215
    %v230 = vpack.c.b16 %v218, %v217
    %v231 = vpack.c.b16 %v220, %v219
    %v232 = vpack.c.b16 %v222, %v221
    %v233 = vpack.c.b16 %v224, %v223
    %v234 = vpack.c.b16 %v226, %v225
    %243 = vmatpush.bf16.msra.mxu0 %v234
    %244 = vmatpush.bf16.msra.mxu0 %v233
    %245 = vmatpush.bf16.msra.mxu0 %v232
    %246 = vmatpush.bf16.msra.mxu0 %v231
    %247 = vmatpush.bf16.msra.mxu0 %v230
    %248 = vmatpush.bf16.msra.mxu0 %v229
    %249 = vmatpush.bf16.msra.mxu0 %v228
    %250 = vmatpush.bf16.msra.mxu0 %v227
    %251 = vmatmul.bf16.gmra.mxu0 %v179
    %v252 = vpop.f32.mrf.mxu0
    %v253 = vadd.f32 %v145, %v252
    %v254 = vpop.f32.mrf.mxu0
    %v255 = vadd.f32 %v145, %v254
    %256 = vmatmul.bf16.gmra.mxu0 %v180
    %v257 = vpop.f32.mrf.mxu0
    %v258 = vadd.f32 %v145, %v257
    %v259 = vpop.f32.mrf.mxu0
    %v260 = vadd.f32 %v145, %v259
    %261 = vmatmul.bf16.gmra.mxu0 %v181
    %v262 = vpop.f32.mrf.mxu0
    %v263 = vadd.f32 %v145, %v262
    %v264 = vpop.f32.mrf.mxu0
    %v265 = vadd.f32 %v145, %v264
    %266 = vmatmul.bf16.gmra.mxu0 %v182
    %v267 = vpop.f32.mrf.mxu0
    %v268 = vadd.f32 %v145, %v267
    %v269 = vpop.f32.mrf.mxu0
    %v270 = vadd.f32 %v145, %v269
    %271 = vmatmul.bf16.gmra.mxu0 %v183
    %v272 = vpop.f32.mrf.mxu0
    %v273 = vadd.f32 %v145, %v272
    %v274 = vpop.f32.mrf.mxu0
    %v275 = vadd.f32 %v145, %v274
    %276 = vmatmul.bf16.gmra.mxu0 %v184
    %v277 = vpop.f32.mrf.mxu0
    %v278 = vadd.f32 %v145, %v277
    %v279 = vpop.f32.mrf.mxu0
    %v280 = vadd.f32 %v145, %v279
    %281 = vmatmul.bf16.gmra.mxu0 %v185
    %v282 = vpop.f32.mrf.mxu0
    %v283 = vadd.f32 %v145, %v282
    %v284 = vpop.f32.mrf.mxu0
    %v285 = vadd.f32 %v145, %v284
    %286 = vmatmul.bf16.gmra.mxu0 %v186
    %v287 = vpop.f32.mrf.mxu0
    %v288 = vadd.f32 %v145, %v287
    %v289 = vpop.f32.mrf.mxu0
    %v290 = vadd.f32 %v145, %v289
    %291 = vdwg.mxu0
    %v292 = vmax.f32 %v253, 0.0
    %v293 = vmax.f32 %v255, 0.0
    %v294 = vmax.f32 %v258, 0.0
    %v295 = vmax.f32 %v260, 0.0
    %v296 = vmax.f32 %v263, 0.0
    %v297 = vmax.f32 %v265, 0.0
    %v298 = vmax.f32 %v268, 0.0
    %v299 = vmax.f32 %v270, 0.0
    %v300 = vmax.f32 %v273, 0.0
    %v301 = vmax.f32 %v275, 0.0
    %v302 = vmax.f32 %v278, 0.0
    %v303 = vmax.f32 %v280, 0.0
    %v304 = vmax.f32 %v283, 0.0
    %v305 = vmax.f32 %v285, 0.0
    %v306 = vmax.f32 %v288, 0.0
    %v307 = vmax.f32 %v290, 0.0
    %v308 = vpack.c.bf16 %v293, %v292
    %v309 = vpack.c.bf16 %v295, %v294
    %v310 = vpack.c.bf16 %v297, %v296
    %v311 = vpack.c.bf16 %v299, %v298
    %v312 = vpack.c.bf16 %v301, %v300
    %v313 = vpack.c.bf16 %v303, %v302
    %v314 = vpack.c.bf16 %v305, %v304
    %v315 = vpack.c.bf16 %v307, %v306
    %v316 = vld [vmem:[#allocation7] sm:$0xf]
    %v317 = vld [vmem:[#allocation7 + $0x4] sm:$0xf]
    %v318 = vld [vmem:[#allocation7 + $0x8] sm:$0xf]
    %v319 = vld [vmem:[#allocation7 + $0xc] sm:$0xf]
    %v320 = vld [vmem:[#allocation7 + $0x10] sm:$0xf]
    %v321 = vld [vmem:[#allocation7 + $0x14] sm:$0xf]
    %v322 = vld [vmem:[#allocation7 + $0x18] sm:$0xf]
    %v323 = vld [vmem:[#allocation7 + $0x1c] sm:$0xf]
    %v324 = vld [vmem:[#allocation7 + $0x20] sm:$0xf]
    %v325 = vld [vmem:[#allocation7 + $0x24] sm:$0xf]
    %v326 = vld [vmem:[#allocation7 + $0x28] sm:$0xf]
    %v327 = vld [vmem:[#allocation7 + $0x2c] sm:$0xf]
    %v328 = vld [vmem:[#allocation7 + $0x30] sm:$0xf]
    %v329 = vld [vmem:[#allocation7 + $0x34] sm:$0xf]
    %v330 = vld [vmem:[#allocation7 + $0x38] sm:$0xf]
    %v331 = vld [vmem:[#allocation7 + $0x3c] sm:$0xf]
    %v332 = vld [vmem:[%s4] sm:$0x1]
    %v334 = vperm.slane %v332, 0
    %v352 = vunpack.c.l.b16 %v316
    %v353 = vunpack.c.l.b16 %v317
    %v354 = vunpack.c.l.b16 %v318
    %v355 = vunpack.c.l.b16 %v319
    %v356 = vunpack.c.l.b16 %v320
    %v357 = vunpack.c.l.b16 %v321
    %v358 = vunpack.c.l.b16 %v322
    %v359 = vunpack.c.l.b16 %v323
    %v360 = vunpack.c.l.b16 %v324
    %v361 = vunpack.c.l.b16 %v325
    %v362 = vunpack.c.l.b16 %v326
    %v363 = vunpack.c.l.b16 %v327
    %v364 = vunpack.c.l.b16 %v328
    %v365 = vunpack.c.l.b16 %v329
    %v366 = vunpack.c.l.b16 %v330
    %v367 = vunpack.c.l.b16 %v331
    %v368 = vpack.c.b16 %v353, %v352
    %v369 = vpack.c.b16 %v355, %v354
    %v370 = vpack.c.b16 %v357, %v356
    %v371 = vpack.c.b16 %v359, %v358
    %v372 = vpack.c.b16 %v361, %v360
    %v373 = vpack.c.b16 %v363, %v362
    %v374 = vpack.c.b16 %v365, %v364
    %v375 = vpack.c.b16 %v367, %v366
    %384 = vmatpush.bf16.msra.mxu0 %v375
    %385 = vmatpush.bf16.msra.mxu0 %v374
    %386 = vmatpush.bf16.msra.mxu0 %v373
    %387 = vmatpush.bf16.msra.mxu0 %v372
    %388 = vmatpush.bf16.msra.mxu0 %v371
    %389 = vmatpush.bf16.msra.mxu0 %v370
    %390 = vmatpush.bf16.msra.mxu0 %v369
    %391 = vmatpush.bf16.msra.mxu0 %v368
    %392 = vmatmul.bf16.gmra.mxu0 %v308
    %v393 = vpop.f32.mrf.mxu0
    %v394 = vadd.f32 %v334, %v393
    %v395 = vpop.f32.mrf.mxu0
    %v396 = vadd.f32 %v334, %v395
    %397 = vmatmul.bf16.gmra.mxu0 %v309
    %v398 = vpop.f32.mrf.mxu0
    %v399 = vadd.f32 %v334, %v398
    %v400 = vpop.f32.mrf.mxu0
    %v401 = vadd.f32 %v334, %v400
    %402 = vmatmul.bf16.gmra.mxu0 %v310
    %v403 = vpop.f32.mrf.mxu0
    %v404 = vadd.f32 %v334, %v403
    %v405 = vpop.f32.mrf.mxu0
    %v406 = vadd.f32 %v334, %v405
    %407 = vmatmul.bf16.gmra.mxu0 %v311
    %v408 = vpop.f32.mrf.mxu0
    %v409 = vadd.f32 %v334, %v408
    %v410 = vpop.f32.mrf.mxu0
    %v411 = vadd.f32 %v334, %v410
    %412 = vmatmul.bf16.gmra.mxu0 %v312
    %v413 = vpop.f32.mrf.mxu0
    %v414 = vadd.f32 %v334, %v413
    %v415 = vpop.f32.mrf.mxu0
    %v416 = vadd.f32 %v334, %v415
    %417 = vmatmul.bf16.gmra.mxu0 %v313
    %v418 = vpop.f32.mrf.mxu0
    %v419 = vadd.f32 %v334, %v418
    %v420 = vpop.f32.mrf.mxu0
    %v421 = vadd.f32 %v334, %v420
    %422 = vmatmul.bf16.gmra.mxu0 %v314
    %v423 = vpop.f32.mrf.mxu0
    %v424 = vadd.f32 %v334, %v423
    %v425 = vpop.f32.mrf.mxu0
    %v426 = vadd.f32 %v334, %v425
    %427 = vmatmul.bf16.gmra.mxu0 %v315
    %v428 = vpop.f32.mrf.mxu0
    %v429 = vadd.f32 %v334, %v428
    %v430 = vpop.f32.mrf.mxu0
    %v431 = vadd.f32 %v334, %v430
    %432 = vdwg.mxu0
    %v433 = vmax.f32 %v394, 0.0
    %v434 = vmax.f32 %v396, 0.0
    %v435 = vmax.f32 %v399, 0.0
    %v436 = vmax.f32 %v401, 0.0
    %v437 = vmax.f32 %v404, 0.0
    %v438 = vmax.f32 %v406, 0.0
    %v439 = vmax.f32 %v409, 0.0
    %v440 = vmax.f32 %v411, 0.0
    %v441 = vmax.f32 %v414, 0.0
    %v442 = vmax.f32 %v416, 0.0
    %v443 = vmax.f32 %v419, 0.0
    %v444 = vmax.f32 %v421, 0.0
    %v445 = vmax.f32 %v424, 0.0
    %v446 = vmax.f32 %v426, 0.0
    %v447 = vmax.f32 %v429, 0.0
    %v448 = vmax.f32 %v431, 0.0
    %v449 = vpack.c.bf16 %v434, %v433
    %v450 = vpack.c.bf16 %v436, %v435
    %v451 = vpack.c.bf16 %v438, %v437
    %v452 = vpack.c.bf16 %v440, %v439
    %v453 = vpack.c.bf16 %v442, %v441
    %v454 = vpack.c.bf16 %v444, %v443
    %v455 = vpack.c.bf16 %v446, %v445
    %v456 = vpack.c.bf16 %v448, %v447
    %v457 = vld [vmem:[#allocation8] sm:$0xf]
    %v458 = vld [vmem:[#allocation8 + $0x4] sm:$0xf]
    %v459 = vld [vmem:[#allocation8 + $0x8] sm:$0xf]
    %v460 = vld [vmem:[#allocation8 + $0xc] sm:$0xf]
    %v461 = vld [vmem:[#allocation8 + $0x10] sm:$0xf]
    %v462 = vld [vmem:[#allocation8 + $0x14] sm:$0xf]
    %v463 = vld [vmem:[#allocation8 + $0x18] sm:$0xf]
    %v464 = vld [vmem:[#allocation8 + $0x1c] sm:$0xf]
    %v465 = vld [vmem:[#allocation8 + $0x20] sm:$0xf]
    %v466 = vld [vmem:[#allocation8 + $0x24] sm:$0xf]
    %v467 = vld [vmem:[#allocation8 + $0x28] sm:$0xf]
    %v468 = vld [vmem:[#allocation8 + $0x2c] sm:$0xf]
    %v469 = vld [vmem:[#allocation8 + $0x30] sm:$0xf]
    %v470 = vld [vmem:[#allocation8 + $0x34] sm:$0xf]
    %v471 = vld [vmem:[#allocation8 + $0x38] sm:$0xf]
    %v472 = vld [vmem:[#allocation8 + $0x3c] sm:$0xf]
    %v473 = vld [vmem:[%s6] sm:$0x1]
    %v475 = vperm.slane %v473, 0
    %v493 = vunpack.c.l.b16 %v457
    %v494 = vunpack.c.l.b16 %v458
    %v495 = vunpack.c.l.b16 %v459
    %v496 = vunpack.c.l.b16 %v460
    %v497 = vunpack.c.l.b16 %v461
    %v498 = vunpack.c.l.b16 %v462
    %v499 = vunpack.c.l.b16 %v463
    %v500 = vunpack.c.l.b16 %v464
    %v501 = vunpack.c.l.b16 %v465
    %v502 = vunpack.c.l.b16 %v466
    %v503 = vunpack.c.l.b16 %v467
    %v504 = vunpack.c.l.b16 %v468
    %v505 = vunpack.c.l.b16 %v469
    %v506 = vunpack.c.l.b16 %v470
    %v507 = vunpack.c.l.b16 %v471
    %v508 = vunpack.c.l.b16 %v472
    %v509 = vpack.c.b16 %v494, %v493
    %v510 = vpack.c.b16 %v496, %v495
    %v511 = vpack.c.b16 %v498, %v497
    %v512 = vpack.c.b16 %v500, %v499
    %v513 = vpack.c.b16 %v502, %v501
    %v514 = vpack.c.b16 %v504, %v503
    %v515 = vpack.c.b16 %v506, %v505
    %v516 = vpack.c.b16 %v508, %v507
    %525 = vmatpush.bf16.msra.mxu0 %v516
    %526 = vmatpush.bf16.msra.mxu0 %v515
    %527 = vmatpush.bf16.msra.mxu0 %v514
    %528 = vmatpush.bf16.msra.mxu0 %v513
    %529 = vmatpush.bf16.msra.mxu0 %v512
    %530 = vmatpush.bf16.msra.mxu0 %v511
    %531 = vmatpush.bf16.msra.mxu0 %v510
    %532 = vmatpush.bf16.msra.mxu0 %v509
    %533 = vmatmul.bf16.gmra.mxu0 %v449
    %v534 = vpop.f32.mrf.mxu0
    %v535 = vadd.f32 %v475, %v534
    %v536 = vpop.f32.mrf.mxu0
    %v537 = vadd.f32 %v475, %v536
    %538 = vmatmul.bf16.gmra.mxu0 %v450
    %v539 = vpop.f32.mrf.mxu0
    %v540 = vadd.f32 %v475, %v539
    %v541 = vpop.f32.mrf.mxu0
    %v542 = vadd.f32 %v475, %v541
    %543 = vmatmul.bf16.gmra.mxu0 %v451
    %v544 = vpop.f32.mrf.mxu0
    %v545 = vadd.f32 %v475, %v544
    %v546 = vpop.f32.mrf.mxu0
    %v547 = vadd.f32 %v475, %v546
    %548 = vmatmul.bf16.gmra.mxu0 %v452
    %v549 = vpop.f32.mrf.mxu0
    %v550 = vadd.f32 %v475, %v549
    %v551 = vpop.f32.mrf.mxu0
    %v552 = vadd.f32 %v475, %v551
    %553 = vmatmul.bf16.gmra.mxu0 %v453
    %v554 = vpop.f32.mrf.mxu0
    %v555 = vadd.f32 %v475, %v554
    %v556 = vpop.f32.mrf.mxu0
    %v557 = vadd.f32 %v475, %v556
    %558 = vmatmul.bf16.gmra.mxu0 %v454
    %v559 = vpop.f32.mrf.mxu0
    %v560 = vadd.f32 %v475, %v559
    %v561 = vpop.f32.mrf.mxu0
    %v562 = vadd.f32 %v475, %v561
    %563 = vmatmul.bf16.gmra.mxu0 %v455
    %v564 = vpop.f32.mrf.mxu0
    %v565 = vadd.f32 %v475, %v564
    %v566 = vpop.f32.mrf.mxu0
    %v567 = vadd.f32 %v475, %v566
    %568 = vmatmul.bf16.gmra.mxu0 %v456
    %v569 = vpop.f32.mrf.mxu0
    %v570 = vadd.f32 %v475, %v569
    %v571 = vpop.f32.mrf.mxu0
    %v572 = vadd.f32 %v475, %v571
    %573 = vdwg.mxu0
    %v574 = vmax.f32 %v535, 0.0
    %v575 = vmax.f32 %v537, 0.0
    %v576 = vmax.f32 %v540, 0.0
    %v577 = vmax.f32 %v542, 0.0
    %v578 = vmax.f32 %v545, 0.0
    %v579 = vmax.f32 %v547, 0.0
    %v580 = vmax.f32 %v550, 0.0
    %v581 = vmax.f32 %v552, 0.0
    %v582 = vmax.f32 %v555, 0.0
    %v583 = vmax.f32 %v557, 0.0
    %v584 = vmax.f32 %v560, 0.0
    %v585 = vmax.f32 %v562, 0.0
    %v586 = vmax.f32 %v565, 0.0
    %v587 = vmax.f32 %v567, 0.0
    %v588 = vmax.f32 %v570, 0.0
    %v589 = vmax.f32 %v572, 0.0
    %v590 = vpack.c.bf16 %v575, %v574
    %v591 = vpack.c.bf16 %v577, %v576
    %v592 = vpack.c.bf16 %v579, %v578
    %v593 = vpack.c.bf16 %v581, %v580
    %v594 = vpack.c.bf16 %v583, %v582
    %v595 = vpack.c.bf16 %v585, %v584
    %v596 = vpack.c.bf16 %v587, %v586
    %v597 = vpack.c.bf16 %v589, %v588
    %v598 = vld [vmem:[#allocation10] sm:$0xf]
    %v599 = vld [vmem:[#allocation10 + $0x4] sm:$0xf]
    %v600 = vld [vmem:[#allocation10 + $0x8] sm:$0xf]
    %v601 = vld [vmem:[#allocation10 + $0xc] sm:$0xf]
    %v602 = vld [vmem:[#allocation10 + $0x10] sm:$0xf]
    %v603 = vld [vmem:[#allocation10 + $0x14] sm:$0xf]
    %v604 = vld [vmem:[#allocation10 + $0x18] sm:$0xf]
    %v605 = vld [vmem:[#allocation10 + $0x1c] sm:$0xf]
    %v606 = vld [vmem:[#allocation10 + $0x20] sm:$0xf]
    %v607 = vld [vmem:[#allocation10 + $0x24] sm:$0xf]
    %v608 = vld [vmem:[#allocation10 + $0x28] sm:$0xf]
    %v609 = vld [vmem:[#allocation10 + $0x2c] sm:$0xf]
    %v610 = vld [vmem:[#allocation10 + $0x30] sm:$0xf]
    %v611 = vld [vmem:[#allocation10 + $0x34] sm:$0xf]
    %v612 = vld [vmem:[#allocation10 + $0x38] sm:$0xf]
    %v613 = vld [vmem:[#allocation10 + $0x3c] sm:$0xf]
    %v614 = vld [vmem:[%s8] sm:$0x1]
    %v616 = vperm.slane %v614, 0
    %v634 = vunpack.c.l.b16 %v598
    %v635 = vunpack.c.l.b16 %v599
    %v636 = vunpack.c.l.b16 %v600
    %v637 = vunpack.c.l.b16 %v601
    %v638 = vunpack.c.l.b16 %v602
    %v639 = vunpack.c.l.b16 %v603
    %v640 = vunpack.c.l.b16 %v604
    %v641 = vunpack.c.l.b16 %v605
    %v642 = vunpack.c.l.b16 %v606
    %v643 = vunpack.c.l.b16 %v607
    %v644 = vunpack.c.l.b16 %v608
    %v645 = vunpack.c.l.b16 %v609
    %v646 = vunpack.c.l.b16 %v610
    %v647 = vunpack.c.l.b16 %v611
    %v648 = vunpack.c.l.b16 %v612
    %v649 = vunpack.c.l.b16 %v613
    %v650 = vpack.c.b16 %v635, %v634
    %v651 = vpack.c.b16 %v637, %v636
    %v652 = vpack.c.b16 %v639, %v638
    %v653 = vpack.c.b16 %v641, %v640
    %v654 = vpack.c.b16 %v643, %v642
    %v655 = vpack.c.b16 %v645, %v644
    %v656 = vpack.c.b16 %v647, %v646
    %v657 = vpack.c.b16 %v649, %v648
    %666 = vmatpush.bf16.msra.mxu0 %v657
    %667 = vmatpush.bf16.msra.mxu0 %v656
    %668 = vmatpush.bf16.msra.mxu0 %v655
    %669 = vmatpush.bf16.msra.mxu0 %v654
    %670 = vmatpush.bf16.msra.mxu0 %v653
    %671 = vmatpush.bf16.msra.mxu0 %v652
    %672 = vmatpush.bf16.msra.mxu0 %v651
    %673 = vmatpush.bf16.msra.mxu0 %v650
    %674 = vmatmul.bf16.gmra.mxu0 %v590
    %v675 = vpop.f32.mrf.mxu0
    %v676 = vadd.f32 %v616, %v675
    %v677 = vpop.f32.mrf.mxu0
    %v678 = vadd.f32 %v616, %v677
    %679 = vmatmul.bf16.gmra.mxu0 %v591
    %v680 = vpop.f32.mrf.mxu0
    %v681 = vadd.f32 %v616, %v680
    %v682 = vpop.f32.mrf.mxu0
    %v683 = vadd.f32 %v616, %v682
    %684 = vmatmul.bf16.gmra.mxu0 %v592
    %v685 = vpop.f32.mrf.mxu0
    %v686 = vadd.f32 %v616, %v685
    %v687 = vpop.f32.mrf.mxu0
    %v688 = vadd.f32 %v616, %v687
    %689 = vmatmul.bf16.gmra.mxu0 %v593
    %v690 = vpop.f32.mrf.mxu0
    %v691 = vadd.f32 %v616, %v690
    %v692 = vpop.f32.mrf.mxu0
    %v693 = vadd.f32 %v616, %v692
    %694 = vmatmul.bf16.gmra.mxu0 %v594
    %v695 = vpop.f32.mrf.mxu0
    %v696 = vadd.f32 %v616, %v695
    %v697 = vpop.f32.mrf.mxu0
    %v698 = vadd.f32 %v616, %v697
    %699 = vmatmul.bf16.gmra.mxu0 %v595
    %v700 = vpop.f32.mrf.mxu0
    %v701 = vadd.f32 %v616, %v700
    %v702 = vpop.f32.mrf.mxu0
    %v703 = vadd.f32 %v616, %v702
    %704 = vmatmul.bf16.gmra.mxu0 %v596
    %v705 = vpop.f32.mrf.mxu0
    %v706 = vadd.f32 %v616, %v705
    %v707 = vpop.f32.mrf.mxu0
    %v708 = vadd.f32 %v616, %v707
    %709 = vmatmul.bf16.gmra.mxu0 %v597
    %v710 = vpop.f32.mrf.mxu0
    %v711 = vadd.f32 %v616, %v710
    %v712 = vpop.f32.mrf.mxu0
    %v713 = vadd.f32 %v616, %v712
    %714 = vdwg.mxu0
    %v715 = vmax.f32 %v676, 0.0
    %v716 = vmax.f32 %v678, 0.0
    %v717 = vmax.f32 %v681, 0.0
    %v718 = vmax.f32 %v683, 0.0
    %v719 = vmax.f32 %v686, 0.0
    %v720 = vmax.f32 %v688, 0.0
    %v721 = vmax.f32 %v691, 0.0
    %v722 = vmax.f32 %v693, 0.0
    %v723 = vmax.f32 %v696, 0.0
    %v724 = vmax.f32 %v698, 0.0
    %v725 = vmax.f32 %v701, 0.0
    %v726 = vmax.f32 %v703, 0.0
    %v727 = vmax.f32 %v706, 0.0
    %v728 = vmax.f32 %v708, 0.0
    %v729 = vmax.f32 %v711, 0.0
    %v730 = vmax.f32 %v713, 0.0
    %731 = vst [vmem:[#allocation11] sm:$0xff] %v715
    %732 = vst [vmem:[#allocation11 + $0x8] sm:$0xff] %v716
    %733 = vst [vmem:[#allocation11 + $0x10] sm:$0xff] %v717
    %734 = vst [vmem:[#allocation11 + $0x18] sm:$0xff] %v718
    %735 = vst [vmem:[#allocation11 + $0x20] sm:$0xff] %v719
    %736 = vst [vmem:[#allocation11 + $0x28] sm:$0xff] %v720
    %737 = vst [vmem:[#allocation11 + $0x30] sm:$0xff] %v721
    %738 = vst [vmem:[#allocation11 + $0x38] sm:$0xff] %v722
    %739 = vst [vmem:[#allocation11 + $0x40] sm:$0xff] %v723
    %740 = vst [vmem:[#allocation11 + $0x48] sm:$0xff] %v724
    %741 = vst [vmem:[#allocation11 + $0x50] sm:$0xff] %v725
    %742 = vst [vmem:[#allocation11 + $0x58] sm:$0xff] %v726
    %743 = vst [vmem:[#allocation11 + $0x60] sm:$0xff] %v727
    %744 = vst [vmem:[#allocation11 + $0x68] sm:$0xff] %v728
    %745 = vst [vmem:[#allocation11 + $0x70] sm:$0xff] %v729
    %746 = vst [vmem:[#allocation11 + $0x78] sm:$0xff] %v730
    // Predicated region
    $region58: #{tpu_custom_call.1} parent=1 // pred_check
      _
    $region59: #{tpu_custom_call.1} parent=1 // pred_check_branch
      %748 = sbr.rel (0) target = $region61
    $region60: #{tpu_custom_call.1} parent=1 // pred_region
      %750 = vsyncadd [#allocation4], 0
      %s751 = sshll.u32 [#allocation11], 4
      %s752 = int_to_ptr.vmem [resolvable:$true] %s751
      %s753 = sshll.u32 %s9, 4
      %s754 = int_to_ptr.hbm [resolvable:$true] %s753
      %759 = dma.vmem_to_hbm [thread:$0]  %s752, 2048, %s754, [#allocation4], 128, 128, 8
    $region61: #{tpu_custom_call.1} parent=1 // pred_fallthru
      _
    // Predicated region
    $region62: #{tpu_custom_call.1} parent=1 // pred_check
      _
    $region63: #{tpu_custom_call.1} parent=1 // pred_check_branch
      %761 = sbr.rel (0) target = $region65
    $region64: #{tpu_custom_call.1} parent=1 // pred_region
      %763 = dma.done [#allocation4], 2048
    $region65: #{tpu_custom_call.1} parent=1 // pred_fallthru
      _
    %764 = vsyncpa [#allocation3], 1
    %765 = vsyncpa [#allocation6], 1
    %766 = vsyncpa [#allocation9], 1
    %767 = vsyncpa [#allocation4], 1

</llo_original>
